<compile_context>
chip_gen: v7x
topology: tpu7x:2x2x1
jax: 0.10.0
libtpu: 0.0.40
codegen_flags: <defaults>
</compile_context>

<pallas_src>
import jax
import jax.numpy as jnp
import numpy as np
from jax import lax
from jax.experimental import pallas as pl
from jax.experimental.pallas import tpu as pltpu

D_MODEL = 32
NHEAD = 2
HEAD_DIM = D_MODEL // NHEAD
DIM_FF = 64
NUM_CLASSES = 7
LN_EPS = 1e-5
LANE = 128

# ---- packed weight-matrix row offsets (all matrices stored (in, out), lane-padded to 128) ----
R_WO = 0                          # (d, d)    rows   0:32
R_W1 = R_WO + D_MODEL             # (d, dff)  rows  32:64
R_W2 = R_W1 + D_MODEL             # (dff, d)  rows  64:128
R_WC = R_W2 + DIM_FF              # (d, 128)  rows 128:160  (classifier, zero-padded cols)
W_ROWS = R_WC + D_MODEL           # 160

# ---- packed bias / LN-param row indices (each row is one vector, zero-padded to 128) ----
V_WEMB, V_BEMB, V_AQKV, V_CQKV, V_BO = 0, 1, 2, 3, 4
V_G1, V_BE1, V_B1, V_B2, V_G2, V_BE2, V_BC = 5, 6, 7, 8, 9, 10, 11
V_ROWS = 16


def eeg_transformer_kernel(x_ref, wm_ref, vec_ref, out_ref):
    # x_ref:   (BB, S, 1)      one batch tile
    # wm_ref:  (W_ROWS, 128)   packed matrices
    # vec_ref: (V_ROWS, 128)   packed biases / LN params / folded QKV vectors
    # out_ref: (1, BB, 128)    lane-dense logits (cols >= NUM_CLASSES are zero)
    BB, S, _ = x_ref.shape
    d, hd, dff = D_MODEL, HEAD_DIM, DIM_FF
    N = BB * S

    wm = wm_ref[...]
    vec = vec_ref[...]

    wo = wm[R_WO:R_WO + d, :d]               # (32, 32)
    w1 = wm[R_W1:R_W1 + d, :dff]             # (32, 64)
    w2 = wm[R_W2:R_W2 + dff, :d]             # (64, 32)
    wc = wm[R_WC:R_WC + d, :]                # (32, 128)

    wemb = vec[V_WEMB, :d]
    bemb = vec[V_BEMB, :d]
    aqkv = vec[V_AQKV, :3 * d]               # w_emb @ Wqkv            (q pre-scaled)
    cqkv = vec[V_CQKV, :3 * d]               # b_emb @ Wqkv + b_qkv    (q pre-scaled)
    bo = vec[V_BO, :d]
    g1 = vec[V_G1, :d]
    be1 = vec[V_BE1, :d]
    b1 = vec[V_B1, :dff]
    b2 = vec[V_B2, :d]
    g2 = vec[V_G2, :d]
    be2 = vec[V_BE2, :d]
    bc = vec[V_BC, :]

    x = x_ref[...]                                  # (BB, S, 1)

    # ---- embedding: nn.Linear(1, d) == broadcast multiply-add (kept for the residual) ----
    h = x * wemb + bemb                             # (BB, S, d)
    hf = h.reshape(N, d)

    # ---- QKV projection with embedding folded in (pure VPU, no MXU matmul) ----
    qkv = x * aqkv + cqkv                           # (BB, S, 3d)

    # ---- multi-head self-attention (2 heads unrolled; dropout = identity) ----
    heads = []
    for hi in range(NHEAD):
        q = qkv[:, :, hi * hd:(hi + 1) * hd]                        # (BB, S, hd)
        k = qkv[:, :, d + hi * hd: d + (hi + 1) * hd]
        v = qkv[:, :, 2 * d + hi * hd: 2 * d + (hi + 1) * hd]
        s = jnp.einsum('bqd,bkd->bqk', q, k, preferred_element_type=jnp.float32)
        s = s - jnp.max(s, axis=-1, keepdims=True)
        p = jnp.exp(s)
        p = p * pl.reciprocal(jnp.sum(p, axis=-1, keepdims=True), approx=True)
        heads.append(jnp.einsum('bqk,bkd->bqd', p, v,
                                preferred_element_type=jnp.float32))
    o = jnp.concatenate(heads, axis=-1).reshape(N, d)               # concat(heads) -> (N, 32)
    attn = jnp.dot(o, wo, preferred_element_type=jnp.float32) + bo  # single out-proj

    # ---- residual + LayerNorm1 (post-norm) ----
    h1 = hf + attn
    mu = jnp.mean(h1, axis=-1, keepdims=True)
    var = jnp.mean((h1 - mu) ** 2, axis=-1, keepdims=True)
    h1 = (h1 - mu) * lax.rsqrt(var + LN_EPS) * g1 + be1

    # ---- feed-forward (ReLU), dropout identity ----
    f = jnp.maximum(jnp.dot(h1, w1, preferred_element_type=jnp.float32) + b1, 0.0)
    f = jnp.dot(f, w2, preferred_element_type=jnp.float32) + b2

    # ---- residual + LayerNorm2 ----
    h2 = h1 + f
    mu2 = jnp.mean(h2, axis=-1, keepdims=True)
    var2 = jnp.mean((h2 - mu2) ** 2, axis=-1, keepdims=True)
    h2 = (h2 - mu2) * lax.rsqrt(var2 + LN_EPS) * g2 + be2

    # ---- mean over sequence + lane-dense (128-wide) classifier ----
    pooled = jnp.mean(h2.reshape(BB, S, d), axis=1)                 # (BB, d)
    out_ref[0] = jnp.dot(pooled, wc, preferred_element_type=jnp.float32) + bc


def pack_params(params):
    """Pack all weights into (W_ROWS, 128) matrices + (V_ROWS, 128) vectors (2 DMAs)."""
    d, hd = D_MODEL, HEAD_DIM
    scale = 1.0 / np.sqrt(hd)
    hp = lax.Precision.HIGHEST

    Wq, Wk, Wv = jnp.split(params['in_proj_w'], 3, axis=0)       # each (d, d) PyTorch (out,in)
    bq, bk, bv = jnp.split(params['in_proj_b'], 3)
    wqkv = jnp.concatenate([Wq.T * scale, Wk.T, Wv.T], axis=1)   # (d, 3d), 1/sqrt(hd) folded
    bqkv = jnp.concatenate([bq * scale, bk, bv])                 # (3d,)

    # fold the Linear(1, d) embedding into the QKV projection:
    #   qkv = x * (w_emb @ Wqkv) + (b_emb @ Wqkv + b_qkv)
    wemb = params['w_emb'].reshape(-1).astype(jnp.float32)       # (d,)
    bemb = params['b_emb'].astype(jnp.float32)                   # (d,)
    aqkv = jnp.einsum('d,de->e', wemb, wqkv, precision=hp)       # (3d,)
    cqkv = jnp.einsum('d,de->e', bemb, wqkv, precision=hp) + bqkv

    def pad_mat(m):
        out = jnp.zeros((m.shape[0], LANE), jnp.float32)
        return out.at[:, :m.shape[1]].set(m.astype(jnp.float32))

    wmats = jnp.concatenate([
        pad_mat(params['out_proj_w'].T),      # rows R_WO
        pad_mat(params['lin1_w'].T),          # rows R_W1
        pad_mat(params['lin2_w'].T),          # rows R_W2
        pad_mat(params['cls_w'].T),           # rows R_WC (cols 7:128 zero)
    ], axis=0)                                # (W_ROWS, 128)

    def pad_vec(v):
        out = jnp.zeros((LANE,), jnp.float32)
        return out.at[:v.shape[0]].set(v.astype(jnp.float32))

    rows = [
        wemb,                                 # V_WEMB
        bemb,                                 # V_BEMB
        aqkv,                                 # V_AQKV
        cqkv,                                 # V_CQKV
        params['out_proj_b'],                 # V_BO
        params['ln1_g'], params['ln1_b'],     # V_G1, V_BE1
        params['lin1_b'], params['lin2_b'],   # V_B1, V_B2
        params['ln2_g'], params['ln2_b'],     # V_G2, V_BE2
        params['cls_b'],                      # V_BC (cols 7:128 zero)
    ]
    vecs = jnp.stack([pad_vec(r) for r in rows], axis=0)          # (12, 128)
    vecs = jnp.concatenate(
        [vecs, jnp.zeros((V_ROWS - vecs.shape[0], LANE), jnp.float32)], axis=0)
    return wmats, vecs


def _batch_block(B, target=8):
    """Largest divisor of B <= target, preferring one that leaves >= 2 grid steps."""
    divisors = [bb for bb in range(1, min(B, target) + 1) if B % bb == 0]
    multi = [bb for bb in divisors if B // bb >= 2]
    return max(multi) if multi else max(divisors)


def eeg_transformer_forward(params, x):
    B, S, _ = x.shape
    wmats, vecs = pack_params(params)
    BB = _batch_block(B)
    G = B // BB

    out = pl.pallas_call(
        eeg_transformer_kernel,
        out_shape=jax.ShapeDtypeStruct((G, BB, LANE), jnp.float32),
        grid=(G,),
        in_specs=[
            pl.BlockSpec((BB, S, 1), lambda b: (b, 0, 0)),        # batch tile of x
            pl.BlockSpec((W_ROWS, LANE), lambda b: (0, 0)),       # packed matrices (resident)
            pl.BlockSpec((V_ROWS, LANE), lambda b: (0, 0)),       # packed vectors (resident)
        ],
        out_specs=pl.BlockSpec((1, BB, LANE), lambda b: (b, 0, 0)),
        compiler_params=pltpu.CompilerParams(
            dimension_semantics=("parallel",),
            vmem_limit_bytes=32 * 1024 * 1024,   # conservative: fits v7x 64 MiB VMEM too
        ),
    )(x, wmats, vecs)
    return out.reshape(B, LANE)[:, :NUM_CLASSES]


def init_params(key):
    d, dff, C = D_MODEL, DIM_FF, NUM_CLASSES
    ks = jax.random.split(key, 6)

    def lin(k, out_f, in_f):
        bound = 1.0 / np.sqrt(in_f)
        k1, k2 = jax.random.split(k)
        w = jax.random.uniform(k1, (out_f, in_f), jnp.float32, -bound, bound)
        b = jax.random.uniform(k2, (out_f,), jnp.float32, -bound, bound)
        return w, b

    w_emb, b_emb = lin(ks[0], d, 1)
    in_w = jax.random.uniform(ks[1], (3 * d, d), jnp.float32, -0.2, 0.2)
    in_b = jnp.zeros((3 * d,), jnp.float32)
    out_w, out_b = lin(ks[2], d, d)
    w1, b1 = lin(ks[3], dff, d)
    w2, b2 = lin(ks[4], d, dff)
    wc, bc = lin(ks[5], C, d)
    return dict(
        w_emb=w_emb, b_emb=b_emb,
        in_proj_w=in_w, in_proj_b=in_b,
        out_proj_w=out_w, out_proj_b=out_b,
        ln1_g=jnp.ones((d,), jnp.float32), ln1_b=jnp.zeros((d,), jnp.float32),
        lin1_w=w1, lin1_b=b1, lin2_w=w2, lin2_b=b2,
        ln2_g=jnp.ones((d,), jnp.float32), ln2_b=jnp.zeros((d,), jnp.float32),
        cls_w=wc, cls_b=bc,
    )


def reference_forward(params, x):
    """Pure-JAX reference with PyTorch (eval-mode) semantics."""
    d, nh, hd = D_MODEL, NHEAD, HEAD_DIM
    B, S, _ = x.shape
    hp = lax.Precision.HIGHEST
    h = jnp.einsum('bsi,di->bsd', x, params['w_emb'], precision=hp) + params['b_emb']
    Wq, Wk, Wv = jnp.split(params['in_proj_w'], 3, axis=0)
    bq, bk, bv = jnp.split(params['in_proj_b'], 3)
    q = jnp.einsum('bsd,ed->bse', h, Wq, precision=hp) + bq
    k = jnp.einsum('bsd,ed->bse', h, Wk, precision=hp) + bk
    v = jnp.einsum('bsd,ed->bse', h, Wv, precision=hp) + bv

    def split(t):
        return t.reshape(B, S, nh, hd).transpose(0, 2, 1, 3)

    qh, kh, vh = split(q), split(k), split(v)
    s = jnp.einsum('bhqd,bhkd->bhqk', qh, kh, precision=hp) / np.sqrt(hd)
    p = jax.nn.softmax(s, axis=-1)
    o = jnp.einsum('bhqk,bhkd->bhqd', p, vh, precision=hp)
    o = o.transpose(0, 2, 1, 3).reshape(B, S, d)
    attn = jnp.einsum('bsd,ed->bse', o, params['out_proj_w'], precision=hp) + params['out_proj_b']

    def ln(t, g, b):
        mu = t.mean(-1, keepdims=True)
        var = ((t - mu) ** 2).mean(-1, keepdims=True)
        return (t - mu) / jnp.sqrt(var + LN_EPS) * g + b

    h1 = ln(h + attn, params['ln1_g'], params['ln1_b'])
    f = jax.nn.relu(jnp.einsum('bsd,fd->bsf', h1, params['lin1_w'], precision=hp)
                    + params['lin1_b'])
    f = jnp.einsum('bsf,df->bsd', f, params['lin2_w'], precision=hp) + params['lin2_b']
    h2 = ln(h1 + f, params['ln2_g'], params['ln2_b'])
    pooled = h2.mean(axis=1)
    return jnp.einsum('bd,cd->bc', pooled, params['cls_w'], precision=hp) + params['cls_b']


if __name__ == "__main__":
    key = jax.random.PRNGKey(0)
    pkey, xkey = jax.random.split(key)
    params = init_params(pkey)

    B, S = 2, 8                       # small shapes: batch=2, seq=8, feature=1
    x = jax.random.normal(xkey, (B, S, 1), dtype=jnp.float32)

    out = eeg_transformer_forward(params, x)
    out = jax.block_until_ready(out)

    ref = reference_forward(params, x)
    np.testing.assert_allclose(np.asarray(out), np.asarray(ref), atol=5e-3, rtol=5e-3)
    assert out.shape == (B, NUM_CLASSES)
    print("KERNEL_OK")
</pallas_src>

<mosaic_0001>
module attributes {stable_mosaic.version = 11 : i64} {
  func.func @eeg_transformer_kernel(%arg0: i32, %arg1: memref<1x8x1xf32, #tpu.memory_space<vmem>>, %arg2: memref<160x128xf32, #tpu.memory_space<vmem>>, %arg3: memref<16x128xf32, #tpu.memory_space<vmem>>, %arg4: memref<1x1x128xf32, #tpu.memory_space<vmem>>) attributes {dimension_semantics = [#tpu.dimension_semantics<parallel>], iteration_bounds = array<i64: 2>, scalar_prefetch = 0 : i64, scratch_operands = 0 : i64, tpu.core_type = #tpu.core_type<tc>, window_params = [{transform_indices = @transform_0, window_bounds = array<i64: 1, 8, 1>}, {pipeline_mode = #tpu.pipeline_mode<synchronous>, transform_indices = @transform_1, window_bounds = array<i64: 160, 128>}, {pipeline_mode = #tpu.pipeline_mode<synchronous>, transform_indices = @transform_2, window_bounds = array<i64: 16, 128>}, {transform_indices = @transform_3, window_bounds = array<i64: 1, 1, 128>}]} {
    %c0 = arith.constant 0 : index
    %c0_0 = arith.constant 0 : index
    %0 = vector.load %arg2[%c0, %c0_0] : memref<160x128xf32, #tpu.memory_space<vmem>>, vector<160x128xf32>
    %c0_1 = arith.constant 0 : index
    %c0_2 = arith.constant 0 : index
    %1 = vector.load %arg3[%c0_1, %c0_2] : memref<16x128xf32, #tpu.memory_space<vmem>>, vector<16x128xf32>
    %2 = vector.extract_strided_slice %0 {offsets = [0, 0], sizes = [32, 32], strides = [1, 1]} : vector<160x128xf32> to vector<32x32xf32>
    %3 = vector.extract_strided_slice %0 {offsets = [32, 0], sizes = [32, 64], strides = [1, 1]} : vector<160x128xf32> to vector<32x64xf32>
    %4 = vector.extract_strided_slice %0 {offsets = [64, 0], sizes = [64, 32], strides = [1, 1]} : vector<160x128xf32> to vector<64x32xf32>
    %5 = vector.extract_strided_slice %0 {offsets = [128, 0], sizes = [32, 128], strides = [1, 1]} : vector<160x128xf32> to vector<32x128xf32>
    %6 = vector.extract_strided_slice %1 {offsets = [0, 0], sizes = [1, 32], strides = [1, 1]} : vector<16x128xf32> to vector<1x32xf32>
    %7 = vector.shape_cast %6 : vector<1x32xf32> to vector<32xf32>
    %8 = vector.extract_strided_slice %1 {offsets = [1, 0], sizes = [1, 32], strides = [1, 1]} : vector<16x128xf32> to vector<1x32xf32>
    %9 = vector.shape_cast %8 : vector<1x32xf32> to vector<32xf32>
    %10 = vector.extract_strided_slice %1 {offsets = [2, 0], sizes = [1, 96], strides = [1, 1]} : vector<16x128xf32> to vector<1x96xf32>
    %11 = vector.shape_cast %10 : vector<1x96xf32> to vector<96xf32>
    %12 = vector.extract_strided_slice %1 {offsets = [3, 0], sizes = [1, 96], strides = [1, 1]} : vector<16x128xf32> to vector<1x96xf32>
    %13 = vector.shape_cast %12 : vector<1x96xf32> to vector<96xf32>
    %14 = vector.extract_strided_slice %1 {offsets = [4, 0], sizes = [1, 32], strides = [1, 1]} : vector<16x128xf32> to vector<1x32xf32>
    %15 = vector.shape_cast %14 : vector<1x32xf32> to vector<32xf32>
    %16 = vector.extract_strided_slice %1 {offsets = [5, 0], sizes = [1, 32], strides = [1, 1]} : vector<16x128xf32> to vector<1x32xf32>
    %17 = vector.shape_cast %16 : vector<1x32xf32> to vector<32xf32>
    %18 = vector.extract_strided_slice %1 {offsets = [6, 0], sizes = [1, 32], strides = [1, 1]} : vector<16x128xf32> to vector<1x32xf32>
    %19 = vector.shape_cast %18 : vector<1x32xf32> to vector<32xf32>
    %20 = vector.extract_strided_slice %1 {offsets = [7, 0], sizes = [1, 64], strides = [1, 1]} : vector<16x128xf32> to vector<1x64xf32>
    %21 = vector.shape_cast %20 : vector<1x64xf32> to vector<64xf32>
    %22 = vector.extract_strided_slice %1 {offsets = [8, 0], sizes = [1, 32], strides = [1, 1]} : vector<16x128xf32> to vector<1x32xf32>
    %23 = vector.shape_cast %22 : vector<1x32xf32> to vector<32xf32>
    %24 = vector.extract_strided_slice %1 {offsets = [9, 0], sizes = [1, 32], strides = [1, 1]} : vector<16x128xf32> to vector<1x32xf32>
    %25 = vector.shape_cast %24 : vector<1x32xf32> to vector<32xf32>
    %26 = vector.extract_strided_slice %1 {offsets = [10, 0], sizes = [1, 32], strides = [1, 1]} : vector<16x128xf32> to vector<1x32xf32>
    %27 = vector.shape_cast %26 : vector<1x32xf32> to vector<32xf32>
    %28 = vector.extract_strided_slice %1 {offsets = [11, 0], sizes = [1, 128], strides = [1, 1]} : vector<16x128xf32> to vector<1x128xf32>
    %29 = vector.shape_cast %28 : vector<1x128xf32> to vector<128xf32>
    %c0_3 = arith.constant 0 : index
    %c0_4 = arith.constant 0 : index
    %c0_5 = arith.constant 0 : index
    %30 = vector.load %arg1[%c0_3, %c0_4, %c0_5] : memref<1x8x1xf32, #tpu.memory_space<vmem>>, vector<1x8x1xf32>
    %31 = vector.shape_cast %7 : vector<32xf32> to vector<1x1x32xf32>
    %32 = vector.broadcast %30 : vector<1x8x1xf32> to vector<1x8x32xf32>
    %33 = vector.broadcast %31 : vector<1x1x32xf32> to vector<1x8x32xf32>
    %34 = arith.mulf %32, %33 : vector<1x8x32xf32>
    %35 = vector.shape_cast %9 : vector<32xf32> to vector<1x1x32xf32>
    %36 = vector.broadcast %35 : vector<1x1x32xf32> to vector<1x8x32xf32>
    %37 = arith.addf %34, %36 : vector<1x8x32xf32>
    %38 = vector.shape_cast %37 : vector<1x8x32xf32> to vector<8x32xf32>
    %39 = vector.shape_cast %11 : vector<96xf32> to vector<1x1x96xf32>
    %40 = vector.broadcast %30 : vector<1x8x1xf32> to vector<1x8x96xf32>
    %41 = vector.broadcast %39 : vector<1x1x96xf32> to vector<1x8x96xf32>
    %42 = arith.mulf %40, %41 : vector<1x8x96xf32>
    %43 = vector.shape_cast %13 : vector<96xf32> to vector<1x1x96xf32>
    %44 = vector.broadcast %43 : vector<1x1x96xf32> to vector<1x8x96xf32>
    %45 = arith.addf %42, %44 : vector<1x8x96xf32>
    %46 = vector.extract_strided_slice %45 {offsets = [0, 0, 0], sizes = [1, 8, 16], strides = [1, 1, 1]} : vector<1x8x96xf32> to vector<1x8x16xf32>
    %47 = vector.extract_strided_slice %45 {offsets = [0, 0, 32], sizes = [1, 8, 16], strides = [1, 1, 1]} : vector<1x8x96xf32> to vector<1x8x16xf32>
    %48 = vector.extract_strided_slice %45 {offsets = [0, 0, 64], sizes = [1, 8, 16], strides = [1, 1, 1]} : vector<1x8x96xf32> to vector<1x8x16xf32>
    "tpu.trace_start"() <{level = 10 : i32, message = "bqd,bkd->bqk"}> : () -> ()
    %cst = arith.constant dense<0.000000e+00> : vector<1x8x8xf32>
    %49 = tpu.matmul %46, %47, %cst {dimension_numbers = #tpu.dot_dimension_numbers<[2], [2], [1], [1], [0, 0, 0, 1, 1, 1], [0], [0]>} : vector<1x8x16xf32>, vector<1x8x16xf32>, vector<1x8x8xf32> -> vector<1x8x8xf32>
    "tpu.trace_stop"() : () -> ()
    %cst_6 = arith.constant dense<0xFF800000> : vector<1x8xf32>
    %50 = vector.multi_reduction <maximumf>, %49, %cst_6 [2] : vector<1x8x8xf32> to vector<1x8xf32>
    %51 = vector.shape_cast %50 : vector<1x8xf32> to vector<1x8x1xf32>
    %52 = vector.broadcast %51 : vector<1x8x1xf32> to vector<1x8x8xf32>
    %53 = arith.subf %49, %52 : vector<1x8x8xf32>
    %54 = math.exp %53 : vector<1x8x8xf32>
    %cst_7 = arith.constant dense<0.000000e+00> : vector<1x8xf32>
    %55 = vector.multi_reduction <add>, %54, %cst_7 [2] : vector<1x8x8xf32> to vector<1x8xf32>
    %56 = vector.shape_cast %55 : vector<1x8xf32> to vector<1x8x1xf32>
    %57 = tpu.reciprocal %56 {approx = true} : vector<1x8x1xf32> -> vector<1x8x1xf32>
    %58 = vector.broadcast %57 : vector<1x8x1xf32> to vector<1x8x8xf32>
    %59 = arith.mulf %54, %58 : vector<1x8x8xf32>
    "tpu.trace_start"() <{level = 10 : i32, message = "bqk,bkd->bqd"}> : () -> ()
    %cst_8 = arith.constant dense<0.000000e+00> : vector<1x8x16xf32>
    %60 = tpu.matmul %59, %48, %cst_8 {dimension_numbers = #tpu.dot_dimension_numbers<[2], [1], [1], [2], [0, 0, 0, 1, 1, 2], [0], [0]>} : vector<1x8x8xf32>, vector<1x8x16xf32>, vector<1x8x16xf32> -> vector<1x8x16xf32>
    "tpu.trace_stop"() : () -> ()
    %61 = vector.extract_strided_slice %45 {offsets = [0, 0, 16], sizes = [1, 8, 16], strides = [1, 1, 1]} : vector<1x8x96xf32> to vector<1x8x16xf32>
    %62 = vector.extract_strided_slice %45 {offsets = [0, 0, 48], sizes = [1, 8, 16], strides = [1, 1, 1]} : vector<1x8x96xf32> to vector<1x8x16xf32>
    %63 = vector.extract_strided_slice %45 {offsets = [0, 0, 80], sizes = [1, 8, 16], strides = [1, 1, 1]} : vector<1x8x96xf32> to vector<1x8x16xf32>
    "tpu.trace_start"() <{level = 10 : i32, message = "bqd,bkd->bqk"}> : () -> ()
    %cst_9 = arith.constant dense<0.000000e+00> : vector<1x8x8xf32>
    %64 = tpu.matmul %61, %62, %cst_9 {dimension_numbers = #tpu.dot_dimension_numbers<[2], [2], [1], [1], [0, 0, 0, 1, 1, 1], [0], [0]>} : vector<1x8x16xf32>, vector<1x8x16xf32>, vector<1x8x8xf32> -> vector<1x8x8xf32>
    "tpu.trace_stop"() : () -> ()
    %cst_10 = arith.constant dense<0xFF800000> : vector<1x8xf32>
    %65 = vector.multi_reduction <maximumf>, %64, %cst_10 [2] : vector<1x8x8xf32> to vector<1x8xf32>
    %66 = vector.shape_cast %65 : vector<1x8xf32> to vector<1x8x1xf32>
    %67 = vector.broadcast %66 : vector<1x8x1xf32> to vector<1x8x8xf32>
    %68 = arith.subf %64, %67 : vector<1x8x8xf32>
    %69 = math.exp %68 : vector<1x8x8xf32>
    %cst_11 = arith.constant dense<0.000000e+00> : vector<1x8xf32>
    %70 = vector.multi_reduction <add>, %69, %cst_11 [2] : vector<1x8x8xf32> to vector<1x8xf32>
    %71 = vector.shape_cast %70 : vector<1x8xf32> to vector<1x8x1xf32>
    %72 = tpu.reciprocal %71 {approx = true} : vector<1x8x1xf32> -> vector<1x8x1xf32>
    %73 = vector.broadcast %72 : vector<1x8x1xf32> to vector<1x8x8xf32>
    %74 = arith.mulf %69, %73 : vector<1x8x8xf32>
    "tpu.trace_start"() <{level = 10 : i32, message = "bqk,bkd->bqd"}> : () -> ()
    %cst_12 = arith.constant dense<0.000000e+00> : vector<1x8x16xf32>
    %75 = tpu.matmul %74, %63, %cst_12 {dimension_numbers = #tpu.dot_dimension_numbers<[2], [1], [1], [2], [0, 0, 0, 1, 1, 2], [0], [0]>} : vector<1x8x8xf32>, vector<1x8x16xf32>, vector<1x8x16xf32> -> vector<1x8x16xf32>
    "tpu.trace_stop"() : () -> ()
    %76 = tpu.concatenate %60, %75 in 2 : vector<1x8x16xf32>, vector<1x8x16xf32> -> vector<1x8x32xf32>
    %77 = vector.shape_cast %76 : vector<1x8x32xf32> to vector<8x32xf32>
    %cst_13 = arith.constant dense<0.000000e+00> : vector<8x32xf32>
    %78 = tpu.matmul %77, %2, %cst_13 {dimension_numbers = #tpu.dot_dimension_numbers<[1], [0], [0], [1], [0, 0, 1, 1], [], []>} : vector<8x32xf32>, vector<32x32xf32>, vector<8x32xf32> -> vector<8x32xf32>
    %79 = vector.shape_cast %15 : vector<32xf32> to vector<1x32xf32>
    %80 = vector.broadcast %79 : vector<1x32xf32> to vector<8x32xf32>
    %81 = arith.addf %78, %80 : vector<8x32xf32>
    %82 = arith.addf %38, %81 : vector<8x32xf32>
    %cst_14 = arith.constant dense<0.000000e+00> : vector<8xf32>
    %83 = vector.multi_reduction <add>, %82, %cst_14 [1] : vector<8x32xf32> to vector<8xf32>
    %84 = vector.shape_cast %83 : vector<8xf32> to vector<8x1xf32>
    %cst_15 = arith.constant 3.200000e+01 : f32
    %85 = vector.broadcast %cst_15 : f32 to vector<8x1xf32>
    %86 = arith.divf %84, %85 : vector<8x1xf32>
    %87 = vector.broadcast %86 : vector<8x1xf32> to vector<8x32xf32>
    %88 = arith.subf %82, %87 : vector<8x32xf32>
    %89 = arith.mulf %88, %88 : vector<8x32xf32>
    %cst_16 = arith.constant dense<0.000000e+00> : vector<8xf32>
    %90 = vector.multi_reduction <add>, %89, %cst_16 [1] : vector<8x32xf32> to vector<8xf32>
    %91 = vector.shape_cast %90 : vector<8xf32> to vector<8x1xf32>
    %cst_17 = arith.constant 3.200000e+01 : f32
    %92 = vector.broadcast %cst_17 : f32 to vector<8x1xf32>
    %93 = arith.divf %91, %92 : vector<8x1xf32>
    %94 = vector.broadcast %86 : vector<8x1xf32> to vector<8x32xf32>
    %95 = arith.subf %82, %94 : vector<8x32xf32>
    %cst_18 = arith.constant 9.99999974E-6 : f32
    %96 = vector.broadcast %cst_18 : f32 to vector<8x1xf32>
    %97 = arith.addf %93, %96 : vector<8x1xf32>
    %98 = math.rsqrt %97 : vector<8x1xf32>
    %99 = vector.broadcast %98 : vector<8x1xf32> to vector<8x32xf32>
    %100 = arith.mulf %95, %99 : vector<8x32xf32>
    %101 = vector.shape_cast %17 : vector<32xf32> to vector<1x32xf32>
    %102 = vector.broadcast %101 : vector<1x32xf32> to vector<8x32xf32>
    %103 = arith.mulf %100, %102 : vector<8x32xf32>
    %104 = vector.shape_cast %19 : vector<32xf32> to vector<1x32xf32>
    %105 = vector.broadcast %104 : vector<1x32xf32> to vector<8x32xf32>
    %106 = arith.addf %103, %105 : vector<8x32xf32>
    %cst_19 = arith.constant dense<0.000000e+00> : vector<8x64xf32>
    %107 = tpu.matmul %106, %3, %cst_19 {dimension_numbers = #tpu.dot_dimension_numbers<[1], [0], [0], [1], [0, 0, 1, 1], [], []>} : vector<8x32xf32>, vector<32x64xf32>, vector<8x64xf32> -> vector<8x64xf32>
    %108 = vector.shape_cast %21 : vector<64xf32> to vector<1x64xf32>
    %109 = vector.broadcast %108 : vector<1x64xf32> to vector<8x64xf32>
    %110 = arith.addf %107, %109 : vector<8x64xf32>
    %cst_20 = arith.constant 0.000000e+00 : f32
    %111 = vector.broadcast %cst_20 : f32 to vector<8x64xf32>
    %112 = arith.maximumf %110, %111 : vector<8x64xf32>
    %cst_21 = arith.constant dense<0.000000e+00> : vector<8x32xf32>
    %113 = tpu.matmul %112, %4, %cst_21 {dimension_numbers = #tpu.dot_dimension_numbers<[1], [0], [0], [1], [0, 0, 1, 1], [], []>} : vector<8x64xf32>, vector<64x32xf32>, vector<8x32xf32> -> vector<8x32xf32>
    %114 = vector.shape_cast %23 : vector<32xf32> to vector<1x32xf32>
    %115 = vector.broadcast %114 : vector<1x32xf32> to vector<8x32xf32>
    %116 = arith.addf %113, %115 : vector<8x32xf32>
    %117 = arith.addf %106, %116 : vector<8x32xf32>
    %cst_22 = arith.constant dense<0.000000e+00> : vector<8xf32>
    %118 = vector.multi_reduction <add>, %117, %cst_22 [1] : vector<8x32xf32> to vector<8xf32>
    %119 = vector.shape_cast %118 : vector<8xf32> to vector<8x1xf32>
    %cst_23 = arith.constant 3.200000e+01 : f32
    %120 = vector.broadcast %cst_23 : f32 to vector<8x1xf32>
    %121 = arith.divf %119, %120 : vector<8x1xf32>
    %122 = vector.broadcast %121 : vector<8x1xf32> to vector<8x32xf32>
    %123 = arith.subf %117, %122 : vector<8x32xf32>
    %124 = arith.mulf %123, %123 : vector<8x32xf32>
    %cst_24 = arith.constant dense<0.000000e+00> : vector<8xf32>
    %125 = vector.multi_reduction <add>, %124, %cst_24 [1] : vector<8x32xf32> to vector<8xf32>
    %126 = vector.shape_cast %125 : vector<8xf32> to vector<8x1xf32>
    %cst_25 = arith.constant 3.200000e+01 : f32
    %127 = vector.broadcast %cst_25 : f32 to vector<8x1xf32>
    %128 = arith.divf %126, %127 : vector<8x1xf32>
    %129 = vector.broadcast %121 : vector<8x1xf32> to vector<8x32xf32>
    %130 = arith.subf %117, %129 : vector<8x32xf32>
    %cst_26 = arith.constant 9.99999974E-6 : f32
    %131 = vector.broadcast %cst_26 : f32 to vector<8x1xf32>
    %132 = arith.addf %128, %131 : vector<8x1xf32>
    %133 = math.rsqrt %132 : vector<8x1xf32>
    %134 = vector.broadcast %133 : vector<8x1xf32> to vector<8x32xf32>
    %135 = arith.mulf %130, %134 : vector<8x32xf32>
    %136 = vector.shape_cast %25 : vector<32xf32> to vector<1x32xf32>
    %137 = vector.broadcast %136 : vector<1x32xf32> to vector<8x32xf32>
    %138 = arith.mulf %135, %137 : vector<8x32xf32>
    %139 = vector.shape_cast %27 : vector<32xf32> to vector<1x32xf32>
    %140 = vector.broadcast %139 : vector<1x32xf32> to vector<8x32xf32>
    %141 = arith.addf %138, %140 : vector<8x32xf32>
    %142 = vector.shape_cast %141 : vector<8x32xf32> to vector<1x8x32xf32>
    %cst_27 = arith.constant dense<0.000000e+00> : vector<1x32xf32>
    %143 = vector.multi_reduction <add>, %142, %cst_27 [1] : vector<1x8x32xf32> to vector<1x32xf32>
    %cst_28 = arith.constant 8.000000e+00 : f32
    %144 = vector.broadcast %cst_28 : f32 to vector<1x32xf32>
    %145 = arith.divf %143, %144 : vector<1x32xf32>
    %cst_29 = arith.constant dense<0.000000e+00> : vector<1x128xf32>
    %146 = tpu.matmul %145, %5, %cst_29 {dimension_numbers = #tpu.dot_dimension_numbers<[1], [0], [0], [1], [0, 0, 1, 1], [], []>} : vector<1x32xf32>, vector<32x128xf32>, vector<1x128xf32> -> vector<1x128xf32>
    %147 = vector.shape_cast %29 : vector<128xf32> to vector<1x128xf32>
    %148 = arith.addf %146, %147 : vector<1x128xf32>
    %c0_30 = arith.constant 0 : index
    %c0_31 = arith.constant 0 : index
    %c0_32 = arith.constant 0 : index
    %149 = vector.load %arg4[%c0_30, %c0_31, %c0_32] : memref<1x1x128xf32, #tpu.memory_space<vmem>>, vector<1x1x128xf32>
    %150 = vector.shape_cast %149 : vector<1x1x128xf32> to vector<1x128xf32>
    %151 = vector.shape_cast %148 : vector<1x128xf32> to vector<1x1x128xf32>
    tpu.vector_store %arg4[%c0_30, %c0_31, %c0_32], %151 {strides = array<i32>} : memref<1x1x128xf32, #tpu.memory_space<vmem>>, vector<1x1x128xf32>,
    return
  }
  func.func @transform_0(%arg0: i32) -> (i32, i32, i32) {
    %c0_i32 = arith.constant 0 : i32
    %c0_i32_0 = arith.constant 0 : i32
    %c0_i32_1 = arith.constant 0 : i32
    return %arg0, %c0_i32, %c0_i32_0 : i32, i32, i32
  }
  func.func @transform_1(%arg0: i32) -> (i32, i32) {
    %c0_i32 = arith.constant 0 : i32
    %c0_i32_0 = arith.constant 0 : i32
    %c0_i32_1 = arith.constant 0 : i32
    return %c0_i32, %c0_i32_0 : i32, i32
  }
  func.func @transform_2(%arg0: i32) -> (i32, i32) {
    %c0_i32 = arith.constant 0 : i32
    %c0_i32_0 = arith.constant 0 : i32
    %c0_i32_1 = arith.constant 0 : i32
    return %c0_i32, %c0_i32_0 : i32, i32
  }
  func.func @transform_3(%arg0: i32) -> (i32, i32, i32) {
    %c0_i32 = arith.constant 0 : i32
    %c0_i32_0 = arith.constant 0 : i32
    %c0_i32_1 = arith.constant 0 : i32
    return %arg0, %c0_i32, %c0_i32_0 : i32, i32, i32
  }
}

</mosaic_0001>

<llo_original>
// kernel: tpu_custom_call.1
$region0: #{tpu_custom_call.1}
  #allocation0 [shape = 'u32[]', space=smem, size = 0x4, offset = 0x4, fixed_abs, tag = 'smem constant byte address 0x4 - core index']
  #allocation1 [shape = 'u32[144,128]{1,0:T(1,128)}', space=vmem, size = 0x12000, scoped, tag = 'internal scratch']
  %s0 = inlined_call_operand.vmem [shape: f32[2,8,1], index: 0, kind: input, shape index: {}]
  %s1 = inlined_call_operand.hbm [shape: f32[160,128], index: 1, kind: input, shape index: {}]
  %s2 = inlined_call_operand.vmem [shape: f32[16,128], index: 2, kind: input, shape index: {}]
  %s3 = inlined_call_operand.hbm [shape: f32[2,1,128], index: 3, kind: output, shape index: {}]
  %s4 = sld [smem:[#allocation0]]
  $region49: #{tpu_custom_call.1} parent=0
    _
  %s6 = ssub.s32 1, %s4
  %s7 = scalar_select 0, %s6, %s4
  $region1: #{tpu_custom_call.1} parent=0
    #allocation2 [shape = 'u8[81920]{0}', space=vmem, size = 0x14000, scoped, tag = 'input window, operand 1, single buffered']
    #allocation3 [shape = 's32[2]{0}', space=sflag, size = 0x8, scoped, tag = 'scoped memory for tpu_custom_call.1']
    #allocation4 [shape = 's32[2]{0}', space=sflag, size = 0x8, scoped, tag = 'scoped memory for tpu_custom_call.1']
    #allocation5 [shape = 'u8[1024]{0}', space=vmem, size = 0x400, scoped, tag = 'output window, operand 0']
    %8 = vsyncpa [#allocation3], 0
    %9 = vsyncpa [#allocation4], 0
    %s10 = scalar_lea.sflag [#allocation4], 1
    %11 = vsyncpa %s10, 0
    loop: start=0, step=1, limit=4
    $region2: #{tpu_custom_call.1} parent=1 // loop_pre_header
      _
    $region3: #{tpu_custom_call.1} parent=1 // loop_header
      %s13 = sphi 0, %s17
      %p14 = scmp.ge.s32.totalorder %s13, 4
      %s23 = sphi 0, %s25
      %s26 = sphi 0, %s23
      %s27 = sphi 0, %s26
      %s43 = sphi 0, %s27
      %s47 = sphi 0, %s47
      %s49 = sphi 0, %s47
      %s50 = sphi 0, %s49
      %s64 = sphi 0, %s50
      %s68 = sphi 0, %s68
      %s70 = sphi 0, %s68
      %s71 = sphi 0, %s70
      %s85 = sphi 0, %s71
      %s91 = sphi 0, %s93
      %s94 = sphi 0, %s91
      %s95 = sphi 0, %s94
      %s111 = sphi 0, %s95
    $region4: #{tpu_custom_call.1} parent=1 // loop_header_branch
      %16 = sbr.rel (%p14) target = $region8
    $region5: #{tpu_custom_call.1} parent=1 // loop_body
      %s18 = ssub.s32 %s13, 1
      %s19 = ssub.s32 %s13, 2
      %s20 = sadd.s32 %s13, 1
      %s21 = ssub.s32 %s13, %s20
      %p22 = scmp.eq.s32.totalorder %s21, 0
      %s24 = sadd.s32 %s23, 1
      %s25 = scalar_select %p22, %s23, %s24
      %p28 = pneg %p22
      %p29 = scmp.eq.s32.totalorder %s13, 1
      %p30 = por %p28, %p29
      %p31 = scmp.ne.s32.totalorder %s23, %s26
      %p32 = scmp.eq.s32.totalorder %s13, 0
      %p33 = por %p31, %p32
      %p34 = scmp.ne.s32.totalorder %s23, %s26
      %p35 = scmp.eq.s32.totalorder %s18, 1
      %p36 = por %p34, %p35
      %p37 = scmp.ne.s32.totalorder %s26, %s27
      %p38 = scmp.eq.s32.totalorder %s18, 0
      %p39 = por %p37, %p38
      %p40 = scmp.ne.s32.totalorder %s26, %s27
      %p41 = scmp.eq.s32.totalorder %s19, 1
      %p42 = por %p40, %p41
      %p44 = scmp.ne.s32.totalorder %s27, %s43
      %p45 = scmp.eq.s32.totalorder %s19, 0
      %p46 = por %p44, %p45
      %s48 = sadd.s32 %s47, 1
      %p51 = scmp.eq.s32.totalorder %s13, 1
      %p52 = scmp.ne.s32.totalorder %s47, %s49
      %p53 = scmp.eq.s32.totalorder %s13, 0
      %p54 = por %p52, %p53
      %p55 = scmp.ne.s32.totalorder %s47, %s49
      %p56 = scmp.eq.s32.totalorder %s18, 1
      %p57 = por %p55, %p56
      %p58 = scmp.ne.s32.totalorder %s49, %s50
      %p59 = scmp.eq.s32.totalorder %s18, 0
      %p60 = por %p58, %p59
      %p61 = scmp.ne.s32.totalorder %s49, %s50
      %p62 = scmp.eq.s32.totalorder %s19, 1
      %p63 = por %p61, %p62
      %p65 = scmp.ne.s32.totalorder %s50, %s64
      %p66 = scmp.eq.s32.totalorder %s19, 0
      %p67 = por %p65, %p66
      %s69 = sadd.s32 %s68, 1
      %p72 = scmp.eq.s32.totalorder %s13, 1
      %p73 = scmp.ne.s32.totalorder %s68, %s70
      %p74 = scmp.eq.s32.totalorder %s13, 0
      %p75 = por %p73, %p74
      %p76 = scmp.ne.s32.totalorder %s68, %s70
      %p77 = scmp.eq.s32.totalorder %s18, 1
      %p78 = por %p76, %p77
      %p79 = scmp.ne.s32.totalorder %s70, %s71
      %p80 = scmp.eq.s32.totalorder %s18, 0
      %p81 = por %p79, %p80
      %p82 = scmp.ne.s32.totalorder %s70, %s71
      %p83 = scmp.eq.s32.totalorder %s19, 1
      %p84 = por %p82, %p83
      %p86 = scmp.ne.s32.totalorder %s71, %s85
      %p87 = scmp.eq.s32.totalorder %s19, 0
      %p88 = por %p86, %p87
      %s89 = ssub.s32 %s13, %s20
      %p90 = scmp.eq.s32.totalorder %s89, 0
      %s92 = sadd.s32 %s91, 1
      %s93 = scalar_select %p90, %s91, %s92
      %p96 = pneg %p90
      %p97 = scmp.eq.s32.totalorder %s13, 1
      %p98 = por %p96, %p97
      %p99 = scmp.ne.s32.totalorder %s91, %s94
      %p100 = scmp.eq.s32.totalorder %s13, 0
      %p101 = por %p99, %p100
      %p102 = scmp.ne.s32.totalorder %s91, %s94
      %p103 = scmp.eq.s32.totalorder %s18, 1
      %p104 = por %p102, %p103
      %p105 = scmp.ne.s32.totalorder %s94, %s95
      %p106 = scmp.eq.s32.totalorder %s18, 0
      %p107 = por %p105, %p106
      %p108 = scmp.ne.s32.totalorder %s94, %s95
      %p109 = scmp.eq.s32.totalorder %s19, 1
      %p110 = por %p108, %p109
      %p112 = scmp.ne.s32.totalorder %s95, %s111
      %p113 = scmp.eq.s32.totalorder %s19, 0
      %p114 = por %p112, %p113
      %p115 = scmp.le.s32.totalorder 1, %s13
      %p116 = scmp.lt.s32.totalorder %s13, 3
      %p117 = pnand %p115, %p116
      %p118 = pneg %p117
      // Predicated region
      $region9: #{tpu_custom_call.1} parent=5 // pred_check
        _
      $region10: #{tpu_custom_call.1} parent=5 // pred_check_branch
        %120 = sbr.rel (%p117) target = $region12
      $region11: #{tpu_custom_call.1} parent=5 // pred_region
        %s121 = ssub.s32 %s13, 1
        // Predicated region
        $region13: #{tpu_custom_call.1} parent=11 // pred_check
          %p122 = pneg %p60
        $region14: #{tpu_custom_call.1} parent=11 // pred_check_branch
          %124 = sbr.rel (%p122) target = $region16
        $region15: #{tpu_custom_call.1} parent=11 // pred_region
          %s126 = ssub.s32 2560, 2560
          %127 = vsyncadd [#allocation3], %s126
          %s128 = sshll.u32 [#allocation2], 4
          %s129 = int_to_ptr.vmem [resolvable:$true] %s128
          %134 = dma.hbm_to_vmem [thread:$0]  %s1, 2560, %s129, [#allocation3], 128, 128, 8
        $region16: #{tpu_custom_call.1} parent=11 // pred_fallthru
          _
        // Predicated region
        $region17: #{tpu_custom_call.1} parent=11 // pred_check
          %p135 = pneg %p81
        $region18: #{tpu_custom_call.1} parent=11 // pred_check_branch
          %137 = sbr.rel (%p135) target = $region20
        $region19: #{tpu_custom_call.1} parent=11 // pred_region
          _
        $region20: #{tpu_custom_call.1} parent=11 // pred_fallthru
          _
      $region12: #{tpu_custom_call.1} parent=5 // pred_fallthru
        _
      %p138 = scmp.lt.s32.totalorder %s13, 2
      // Predicated region
      $region21: #{tpu_custom_call.1} parent=5 // pred_check
        %p139 = pneg %p138
      $region22: #{tpu_custom_call.1} parent=5 // pred_check_branch
        %141 = sbr.rel (%p139) target = $region24
      $region23: #{tpu_custom_call.1} parent=5 // pred_region
        // Predicated region
        $region25: #{tpu_custom_call.1} parent=23 // pred_check
          %p142 = pneg %p33
        $region26: #{tpu_custom_call.1} parent=23 // pred_check_branch
          %144 = sbr.rel (%p142) target = $region28
        $region27: #{tpu_custom_call.1} parent=23 // pred_region
          %p145 = scmp.lt.s32.totalorder %s13, 1
          %s146 = scalar_select %p145, %s13, 1
          %s147 = smul.addr %s146, 8
          %s148 = scalar_lea.vmem %s0, %s147
        $region28: #{tpu_custom_call.1} parent=23 // pred_fallthru
          _
      $region24: #{tpu_custom_call.1} parent=5 // pred_fallthru
        _
      %p149 = scmp.le.s32.totalorder 1, %s13
      %p150 = scmp.lt.s32.totalorder %s13, 3
      %p151 = pnand %p149, %p150
      %p152 = pneg %p151
      // Predicated region
      $region29: #{tpu_custom_call.1} parent=5 // pred_check
        _
      $region30: #{tpu_custom_call.1} parent=5 // pred_check_branch
        %154 = sbr.rel (%p151) target = $region32
      $region31: #{tpu_custom_call.1} parent=5 // pred_region
        %s155 = ssub.s32 %s13, 1
        // Predicated region
        $region33: #{tpu_custom_call.1} parent=31 // pred_check
          %p156 = pneg %p60
        $region34: #{tpu_custom_call.1} parent=31 // pred_check_branch
          %158 = sbr.rel (%p156) target = $region36
        $region35: #{tpu_custom_call.1} parent=31 // pred_region
          %159 = dma.done [#allocation3], 2560
        $region36: #{tpu_custom_call.1} parent=31 // pred_fallthru
          _
        %p160 = scmp.lt.s32.totalorder %s18, 1
        %s161 = scalar_select %p160, %s18, 1
        %s162 = smul.addr %s161, 8
        %s163 = scalar_lea.vmem %s0, %s162
        %p164 = pneg %p39
        %p165 = pneg %p36
        %p166 = pneg %p60
        %p167 = pneg %p57
        %p168 = pneg %p81
        %p169 = pneg %p78
        %p170 = pneg %p107
        %p171 = pneg %p104
        %s172 = sand.u32 %s94, 1
        %s173 = scalar_lea.sflag [#allocation4], %s172
        %s174 = sand.u32 %s94, 1
        %s175 = scalar_lea.vmem [#allocation5], %s174
        %p176 = scmp.lt.s32.totalorder %s18, 1
        %s177 = scalar_select %p176, %s18, 1
        %s178 = smul.addr %s177, 8
        %s179 = scalar_lea.vmem %s0, %s178
        %v180 = vld [vmem:[#allocation2] sm:$0xff]
        %v181 = vld [vmem:[#allocation2 + $0x8] sm:$0xff]
        %v182 = vld [vmem:[#allocation2 + $0x10] sm:$0xff]
        %v183 = vld [vmem:[#allocation2 + $0x18] sm:$0xff]
        %v184 = vld [vmem:[#allocation2 + $0x20] sm:$0xff]
        %v185 = vld [vmem:[#allocation2 + $0x28] sm:$0xff]
        %v186 = vld [vmem:[#allocation2 + $0x30] sm:$0xff]
        %v187 = vld [vmem:[#allocation2 + $0x38] sm:$0xff]
        %v188 = vld [vmem:[#allocation2 + $0x40] sm:$0xff]
        %v189 = vld [vmem:[#allocation2 + $0x48] sm:$0xff]
        %v190 = vld [vmem:[#allocation2 + $0x50] sm:$0xff]
        %v191 = vld [vmem:[#allocation2 + $0x58] sm:$0xff]
        %v192 = vld [vmem:[#allocation2 + $0x60] sm:$0xff]
        %v193 = vld [vmem:[#allocation2 + $0x68] sm:$0xff]
        %v194 = vld [vmem:[#allocation2 + $0x70] sm:$0xff]
        %v195 = vld [vmem:[#allocation2 + $0x78] sm:$0xff]
        %v196 = vld [vmem:[#allocation2 + $0x80] sm:$0xff]
        %v197 = vld [vmem:[#allocation2 + $0x88] sm:$0xff]
        %v198 = vld [vmem:[#allocation2 + $0x90] sm:$0xff]
        %v199 = vld [vmem:[#allocation2 + $0x98] sm:$0xff]
        %v200 = vld [vmem:[%s2] sm:$0xff]
        %v201 = vld [vmem:[%s2 + $0x8] sm:$0xff]
        %v202 = vld [vmem:[%s179] sm:$0xff]
        %204 = vset.pattern.permute.xlu0 0
        %205 = vperm.xlu0 %204, %v202
        %v206 = vpop.permute.xlu0 %205
        %v208 = vlaneseq
        %v209 = vshrl.u32 %v208, 7
        %v210 = vsub.s32 0, %v209
        %v211 = vrot.slane %v200, %v210
        %v212 = vmul.f32 %v206, %v211
        %v213 = vlaneseq
        %v214 = vshrl.u32 %v213, 7
        %v215 = vsub.s32 1, %v214
        %v216 = vrot.slane %v200, %v215
        %v217 = vadd.f32 %v212, %v216
        %v218 = vlaneseq
        %v219 = vshrl.u32 %v218, 7
        %v220 = vsub.s32 2, %v219
        %v221 = vrot.slane %v200, %v220
        %v222 = vmul.f32 %v206, %v221
        %v223 = vlaneseq
        %v224 = vshrl.u32 %v223, 7
        %v225 = vsub.s32 3, %v224
        %v226 = vrot.slane %v200, %v225
        %v227 = vadd.f32 %v222, %v226
        %229 = vrot.lane.b32.xlu0 %v227, 96
        %v230 = vpop.permute.xlu0 %229
        %vm231 = vcmask 130048
        %v232 = vsel %vm231, %v227, 0
        %v234 = vsel %vm231, %v230, 0
        %236 = vmatprep.subr.mxu0 0.0
        %237 = vmatpush1.xpose.msra.mxu0 %v234
        %238 = vmatprep.subr.mxu0 0.0
        %239 = vmatpush1.xpose.msra.mxu0 0.0
        %240 = vmatprep.subr.mxu0 0.0
        %241 = vmatpush1.xpose.msra.mxu0 0.0
        %242 = vmatprep.subr.mxu0 0.0
        %243 = vmatpush1.xpose.msra.mxu0 0.0
        %244 = vmatprep.subr.mxu0 0.0
        %245 = vmatpush1.xpose.msra.mxu0 0.0
        %246 = vmatprep.subr.mxu0 0.0
        %247 = vmatpush1.xpose.msra.mxu0 0.0
        %248 = vmatprep.subr.mxu0 0.0
        %249 = vmatpush1.xpose.msra.mxu0 0.0
        %250 = vmatprep.subr.mxu0 0.0
        %251 = vmatpush1.xpose.msra.mxu0 0.0
        %252 = vmatprep.subr.mxu0 0.0
        %253 = vmatpush1.xpose.msra.mxu0 0.0
        %254 = vmatprep.subr.mxu0 0.0
        %255 = vmatpush1.xpose.msra.mxu0 0.0
        %256 = vmatprep.subr.mxu0 0.0
        %257 = vmatpush1.xpose.msra.mxu0 0.0
        %258 = vmatprep.subr.mxu0 0.0
        %259 = vmatpush1.xpose.msra.mxu0 0.0
        %260 = vmatprep.subr.mxu0 0.0
        %261 = vmatpush1.xpose.msra.mxu0 0.0
        %262 = vmatprep.subr.mxu0 0.0
        %263 = vmatpush1.xpose.msra.mxu0 0.0
        %264 = vmatprep.subr.mxu0 0.0
        %265 = vmatpush1.xpose.msra.mxu0 0.0
        %266 = vmatprep.subr.mxu0 0.0
        %267 = vmatpush1.xpose.msra.mxu0 0.0
        %268 = vmatprep.subr.mxu0 0.0
        %269 = vmatpush1.xpose.msra.mxu0 0.0
        %270 = vmatprep.subr.mxu0 0.0
        %271 = vmatpush1.xpose.msra.mxu0 0.0
        %272 = vmatprep.subr.mxu0 0.0
        %273 = vmatpush1.xpose.msra.mxu0 0.0
        %274 = vmatprep.subr.mxu0 0.0
        %275 = vmatpush1.xpose.msra.mxu0 0.0
        %276 = vmatprep.subr.mxu0 0.0
        %277 = vmatpush1.xpose.msra.mxu0 0.0
        %278 = vmatprep.subr.mxu0 0.0
        %279 = vmatpush1.xpose.msra.mxu0 0.0
        %280 = vmatprep.subr.mxu0 0.0
        %281 = vmatpush1.xpose.msra.mxu0 0.0
        %282 = vmatprep.subr.mxu0 0.0
        %283 = vmatpush1.xpose.msra.mxu0 0.0
        %284 = vmatprep.subr.mxu0 0.0
        %285 = vmatpush1.xpose.msra.mxu0 0.0
        %286 = vmatprep.subr.mxu0 0.0
        %287 = vmatpush1.xpose.msra.mxu0 0.0
        %288 = vmatprep.subr.mxu0 0.0
        %289 = vmatpush1.xpose.msra.mxu0 0.0
        %290 = vmatprep.subr.mxu0 0.0
        %291 = vmatpush1.xpose.msra.mxu0 0.0
        %292 = vmatprep.subr.mxu0 0.0
        %293 = vmatpush1.xpose.msra.mxu0 0.0
        %294 = vmatprep.subr.mxu0 0.0
        %295 = vmatpush1.xpose.msra.mxu0 0.0
        %296 = vmatprep.subr.mxu0 0.0
        %297 = vmatpush1.xpose.msra.mxu0 0.0
        %298 = vmatprep.subr.mxu0 0.0
        %299 = vmatpush1.xpose.msra.mxu0 0.0
        %300 = vmatprep.mubr.f32.mxu0 0.0
        %301 = vmatmul.mubr.f32.gmra.mrb[0].mxu0 %v232
        %v302 = vpop.f32.mrb[0].mxu0
        %v303 = vadd.f32 0.0, %v302
        %v304 = vpop.f32.mrb[0].mxu0
        %305 = vdwg.mxu0
        %vm306 = vcmask 64512
        %v307 = vsel %vm306, %v303, -inf
        %308 = vmax.xlane.f32.xlu0 %v307
        %v309 = vpop.xlane.xlu0 %308
        %v310 = vsub.f32 %v303, %v309
        %v311 = vmul.f32 %v310, 1.442695
        %v312 = vpow.pop %v311
        %v313 = vsel %vm306, %v312, 0.0
        %314 = vadd.xlane.f32.xlu0 %v313
        %v315 = vpop.xlane.xlu0 %314
        %v316 = vrcp.pop %v315
        %v317 = vmul.f32 %v312, %v316
        %318 = vrot.lane.b32.xlu0 %v227, 64
        %v319 = vpop.permute.xlu0 %318
        %v322 = vsel %vm306, %v317, 0
        %324 = vmatprep.subr.mxu0 0.0
        %325 = vmatpush1.msra.mxu0 %v319
        %326 = vmatprep.subr.mxu0 0.0
        %327 = vmatpush1.msra.mxu0 0.0
        %328 = vmatprep.subr.mxu0 0.0
        %329 = vmatpush1.msra.mxu0 0.0
        %330 = vmatprep.subr.mxu0 0.0
        %331 = vmatpush1.msra.mxu0 0.0
        %332 = vmatprep.subr.mxu0 0.0
        %333 = vmatpush1.msra.mxu0 0.0
        %334 = vmatprep.subr.mxu0 0.0
        %335 = vmatpush1.msra.mxu0 0.0
        %336 = vmatprep.subr.mxu0 0.0
        %337 = vmatpush1.msra.mxu0 0.0
        %338 = vmatprep.subr.mxu0 0.0
        %339 = vmatpush1.msra.mxu0 0.0
        %340 = vmatprep.subr.mxu0 0.0
        %341 = vmatpush1.msra.mxu0 0.0
        %342 = vmatprep.subr.mxu0 0.0
        %343 = vmatpush1.msra.mxu0 0.0
        %344 = vmatprep.subr.mxu0 0.0
        %345 = vmatpush1.msra.mxu0 0.0
        %346 = vmatprep.subr.mxu0 0.0
        %347 = vmatpush1.msra.mxu0 0.0
        %348 = vmatprep.subr.mxu0 0.0
        %349 = vmatpush1.msra.mxu0 0.0
        %350 = vmatprep.subr.mxu0 0.0
        %351 = vmatpush1.msra.mxu0 0.0
        %352 = vmatprep.subr.mxu0 0.0
        %353 = vmatpush1.msra.mxu0 0.0
        %354 = vmatprep.subr.mxu0 0.0
        %355 = vmatpush1.msra.mxu0 0.0
        %356 = vmatprep.subr.mxu0 0.0
        %357 = vmatpush1.msra.mxu0 0.0
        %358 = vmatprep.subr.mxu0 0.0
        %359 = vmatpush1.msra.mxu0 0.0
        %360 = vmatprep.subr.mxu0 0.0
        %361 = vmatpush1.msra.mxu0 0.0
        %362 = vmatprep.subr.mxu0 0.0
        %363 = vmatpush1.msra.mxu0 0.0
        %364 = vmatprep.subr.mxu0 0.0
        %365 = vmatpush1.msra.mxu0 0.0
        %366 = vmatprep.subr.mxu0 0.0
        %367 = vmatpush1.msra.mxu0 0.0
        %368 = vmatprep.subr.mxu0 0.0
        %369 = vmatpush1.msra.mxu0 0.0
        %370 = vmatprep.subr.mxu0 0.0
        %371 = vmatpush1.msra.mxu0 0.0
        %372 = vmatprep.subr.mxu0 0.0
        %373 = vmatpush1.msra.mxu0 0.0
        %374 = vmatprep.subr.mxu0 0.0
        %375 = vmatpush1.msra.mxu0 0.0
        %376 = vmatprep.subr.mxu0 0.0
        %377 = vmatpush1.msra.mxu0 0.0
        %378 = vmatprep.subr.mxu0 0.0
        %379 = vmatpush1.msra.mxu0 0.0
        %380 = vmatprep.subr.mxu0 0.0
        %381 = vmatpush1.msra.mxu0 0.0
        %382 = vmatprep.subr.mxu0 0.0
        %383 = vmatpush1.msra.mxu0 0.0
        %384 = vmatprep.subr.mxu0 0.0
        %385 = vmatpush1.msra.mxu0 0.0
        %386 = vmatprep.subr.mxu0 0.0
        %387 = vmatpush1.msra.mxu0 0.0
        %388 = vmatprep.mubr.f32.mxu0 0.0
        %389 = vmatmul.mubr.f32.gmra.mrb[0].mxu0 %v322
        %v390 = vpop.f32.mrb[0].mxu0
        %v391 = vadd.f32 0.0, %v390
        %v392 = vpop.f32.mrb[0].mxu0
        %393 = vdwg.mxu0
        %394 = vrot.lane.b32.xlu0 %v227, 112
        %v395 = vpop.permute.xlu0 %394
        %396 = vrot.lane.b32.xlu0 %v227, 80
        %v397 = vpop.permute.xlu0 %396
        %v398 = vsel %vm231, %v395, 0
        %v400 = vsel %vm231, %v397, 0
        %402 = vmatprep.subr.mxu0 0.0
        %403 = vmatpush1.xpose.msra.mxu0 %v400
        %404 = vmatprep.subr.mxu0 0.0
        %405 = vmatpush1.xpose.msra.mxu0 0.0
        %406 = vmatprep.subr.mxu0 0.0
        %407 = vmatpush1.xpose.msra.mxu0 0.0
        %408 = vmatprep.subr.mxu0 0.0
        %409 = vmatpush1.xpose.msra.mxu0 0.0
        %410 = vmatprep.subr.mxu0 0.0
        %411 = vmatpush1.xpose.msra.mxu0 0.0
        %412 = vmatprep.subr.mxu0 0.0
        %413 = vmatpush1.xpose.msra.mxu0 0.0
        %414 = vmatprep.subr.mxu0 0.0
        %415 = vmatpush1.xpose.msra.mxu0 0.0
        %416 = vmatprep.subr.mxu0 0.0
        %417 = vmatpush1.xpose.msra.mxu0 0.0
        %418 = vmatprep.subr.mxu0 0.0
        %419 = vmatpush1.xpose.msra.mxu0 0.0
        %420 = vmatprep.subr.mxu0 0.0
        %421 = vmatpush1.xpose.msra.mxu0 0.0
        %422 = vmatprep.subr.mxu0 0.0
        %423 = vmatpush1.xpose.msra.mxu0 0.0
        %424 = vmatprep.subr.mxu0 0.0
        %425 = vmatpush1.xpose.msra.mxu0 0.0
        %426 = vmatprep.subr.mxu0 0.0
        %427 = vmatpush1.xpose.msra.mxu0 0.0
        %428 = vmatprep.subr.mxu0 0.0
        %429 = vmatpush1.xpose.msra.mxu0 0.0
        %430 = vmatprep.subr.mxu0 0.0
        %431 = vmatpush1.xpose.msra.mxu0 0.0
        %432 = vmatprep.subr.mxu0 0.0
        %433 = vmatpush1.xpose.msra.mxu0 0.0
        %434 = vmatprep.subr.mxu0 0.0
        %435 = vmatpush1.xpose.msra.mxu0 0.0
        %436 = vmatprep.subr.mxu0 0.0
        %437 = vmatpush1.xpose.msra.mxu0 0.0
        %438 = vmatprep.subr.mxu0 0.0
        %439 = vmatpush1.xpose.msra.mxu0 0.0
        %440 = vmatprep.subr.mxu0 0.0
        %441 = vmatpush1.xpose.msra.mxu0 0.0
        %442 = vmatprep.subr.mxu0 0.0
        %443 = vmatpush1.xpose.msra.mxu0 0.0
        %444 = vmatprep.subr.mxu0 0.0
        %445 = vmatpush1.xpose.msra.mxu0 0.0
        %446 = vmatprep.subr.mxu0 0.0
        %447 = vmatpush1.xpose.msra.mxu0 0.0
        %448 = vmatprep.subr.mxu0 0.0
        %449 = vmatpush1.xpose.msra.mxu0 0.0
        %450 = vmatprep.subr.mxu0 0.0
        %451 = vmatpush1.xpose.msra.mxu0 0.0
        %452 = vmatprep.subr.mxu0 0.0
        %453 = vmatpush1.xpose.msra.mxu0 0.0
        %454 = vmatprep.subr.mxu0 0.0
        %455 = vmatpush1.xpose.msra.mxu0 0.0
        %456 = vmatprep.subr.mxu0 0.0
        %457 = vmatpush1.xpose.msra.mxu0 0.0
        %458 = vmatprep.subr.mxu0 0.0
        %459 = vmatpush1.xpose.msra.mxu0 0.0
        %460 = vmatprep.subr.mxu0 0.0
        %461 = vmatpush1.xpose.msra.mxu0 0.0
        %462 = vmatprep.subr.mxu0 0.0
        %463 = vmatpush1.xpose.msra.mxu0 0.0
        %464 = vmatprep.subr.mxu0 0.0
        %465 = vmatpush1.xpose.msra.mxu0 0.0
        %466 = vmatprep.mubr.f32.mxu0 0.0
        %467 = vmatmul.mubr.f32.gmra.mrb[0].mxu0 %v398
        %v468 = vpop.f32.mrb[0].mxu0
        %v469 = vadd.f32 0.0, %v468
        %v470 = vpop.f32.mrb[0].mxu0
        %471 = vdwg.mxu0
        %v472 = vsel %vm306, %v469, -inf
        %473 = vmax.xlane.f32.xlu0 %v472
        %v474 = vpop.xlane.xlu0 %473
        %v475 = vsub.f32 %v469, %v474
        %v476 = vmul.f32 %v475, 1.442695
        %v477 = vpow.pop %v476
        %v478 = vsel %vm306, %v477, 0.0
        %479 = vadd.xlane.f32.xlu0 %v478
        %v480 = vpop.xlane.xlu0 %479
        %v481 = vrcp.pop %v480
        %v482 = vmul.f32 %v477, %v481
        %483 = vrot.lane.b32.xlu0 %v227, 48
        %v484 = vpop.permute.xlu0 %483
        %v487 = vsel %vm306, %v482, 0
        %489 = vmatprep.subr.mxu0 0.0
        %490 = vmatpush1.msra.mxu0 %v484
        %491 = vmatprep.subr.mxu0 0.0
        %492 = vmatpush1.msra.mxu0 0.0
        %493 = vmatprep.subr.mxu0 0.0
        %494 = vmatpush1.msra.mxu0 0.0
        %495 = vmatprep.subr.mxu0 0.0
        %496 = vmatpush1.msra.mxu0 0.0
        %497 = vmatprep.subr.mxu0 0.0
        %498 = vmatpush1.msra.mxu0 0.0
        %499 = vmatprep.subr.mxu0 0.0
        %500 = vmatpush1.msra.mxu0 0.0
        %501 = vmatprep.subr.mxu0 0.0
        %502 = vmatpush1.msra.mxu0 0.0
        %503 = vmatprep.subr.mxu0 0.0
        %504 = vmatpush1.msra.mxu0 0.0
        %505 = vmatprep.subr.mxu0 0.0
        %506 = vmatpush1.msra.mxu0 0.0
        %507 = vmatprep.subr.mxu0 0.0
        %508 = vmatpush1.msra.mxu0 0.0
        %509 = vmatprep.subr.mxu0 0.0
        %510 = vmatpush1.msra.mxu0 0.0
        %511 = vmatprep.subr.mxu0 0.0
        %512 = vmatpush1.msra.mxu0 0.0
        %513 = vmatprep.subr.mxu0 0.0
        %514 = vmatpush1.msra.mxu0 0.0
        %515 = vmatprep.subr.mxu0 0.0
        %516 = vmatpush1.msra.mxu0 0.0
        %517 = vmatprep.subr.mxu0 0.0
        %518 = vmatpush1.msra.mxu0 0.0
        %519 = vmatprep.subr.mxu0 0.0
        %520 = vmatpush1.msra.mxu0 0.0
        %521 = vmatprep.subr.mxu0 0.0
        %522 = vmatpush1.msra.mxu0 0.0
        %523 = vmatprep.subr.mxu0 0.0
        %524 = vmatpush1.msra.mxu0 0.0
        %525 = vmatprep.subr.mxu0 0.0
        %526 = vmatpush1.msra.mxu0 0.0
        %527 = vmatprep.subr.mxu0 0.0
        %528 = vmatpush1.msra.mxu0 0.0
        %529 = vmatprep.subr.mxu0 0.0
        %530 = vmatpush1.msra.mxu0 0.0
        %531 = vmatprep.subr.mxu0 0.0
        %532 = vmatpush1.msra.mxu0 0.0
        %533 = vmatprep.subr.mxu0 0.0
        %534 = vmatpush1.msra.mxu0 0.0
        %535 = vmatprep.subr.mxu0 0.0
        %536 = vmatpush1.msra.mxu0 0.0
        %537 = vmatprep.subr.mxu0 0.0
        %538 = vmatpush1.msra.mxu0 0.0
        %539 = vmatprep.subr.mxu0 0.0
        %540 = vmatpush1.msra.mxu0 0.0
        %541 = vmatprep.subr.mxu0 0.0
        %542 = vmatpush1.msra.mxu0 0.0
        %543 = vmatprep.subr.mxu0 0.0
        %544 = vmatpush1.msra.mxu0 0.0
        %545 = vmatprep.subr.mxu0 0.0
        %546 = vmatpush1.msra.mxu0 0.0
        %547 = vmatprep.subr.mxu0 0.0
        %548 = vmatpush1.msra.mxu0 0.0
        %549 = vmatprep.subr.mxu0 0.0
        %550 = vmatpush1.msra.mxu0 0.0
        %551 = vmatprep.subr.mxu0 0.0
        %552 = vmatpush1.msra.mxu0 0.0
        %553 = vmatprep.mubr.f32.mxu0 0.0
        %554 = vmatmul.mubr.f32.gmra.mrb[0].mxu0 %v487
        %v555 = vpop.f32.mrb[0].mxu0
        %v556 = vadd.f32 0.0, %v555
        %v557 = vpop.f32.mrb[0].mxu0
        %558 = vdwg.mxu0
        %560 = vrot.lane.b32.xlu0 %v556, 16
        %v561 = vpop.permute.xlu0 %560
        %v563 = vsel %vm231, %v391, %v561
        %v564 = vlaneseq
        %v565 = vshrl.u32 %v564, 7
        %v566 = vsub.s32 4, %v565
        %v567 = vrot.slane %v200, %v566
        %vm568 = vcmask 261120
        %v570 = vsel %vm568, %v563, 0
        %572 = vmatprep.subr.mxu0 0.0
        %573 = vmatpush1.msra.mxu0 %v180
        %574 = vmatprep.subr.mxu0 0.0
        %575 = vmatpush1.msra.mxu0 %v181
        %576 = vmatprep.subr.mxu0 0.0
        %577 = vmatpush1.msra.mxu0 %v182
        %578 = vmatprep.subr.mxu0 0.0
        %579 = vmatpush1.msra.mxu0 %v183
        %580 = vmatprep.subr.mxu0 0.0
        %581 = vmatpush1.msra.mxu0 0.0
        %582 = vmatprep.subr.mxu0 0.0
        %583 = vmatpush1.msra.mxu0 0.0
        %584 = vmatprep.subr.mxu0 0.0
        %585 = vmatpush1.msra.mxu0 0.0
        %586 = vmatprep.subr.mxu0 0.0
        %587 = vmatpush1.msra.mxu0 0.0
        %588 = vmatprep.subr.mxu0 0.0
        %589 = vmatpush1.msra.mxu0 0.0
        %590 = vmatprep.subr.mxu0 0.0
        %591 = vmatpush1.msra.mxu0 0.0
        %592 = vmatprep.subr.mxu0 0.0
        %593 = vmatpush1.msra.mxu0 0.0
        %594 = vmatprep.subr.mxu0 0.0
        %595 = vmatpush1.msra.mxu0 0.0
        %596 = vmatprep.subr.mxu0 0.0
        %597 = vmatpush1.msra.mxu0 0.0
        %598 = vmatprep.subr.mxu0 0.0
        %599 = vmatpush1.msra.mxu0 0.0
        %600 = vmatprep.subr.mxu0 0.0
        %601 = vmatpush1.msra.mxu0 0.0
        %602 = vmatprep.subr.mxu0 0.0
        %603 = vmatpush1.msra.mxu0 0.0
        %604 = vmatprep.subr.mxu0 0.0
        %605 = vmatpush1.msra.mxu0 0.0
        %606 = vmatprep.subr.mxu0 0.0
        %607 = vmatpush1.msra.mxu0 0.0
        %608 = vmatprep.subr.mxu0 0.0
        %609 = vmatpush1.msra.mxu0 0.0
        %610 = vmatprep.subr.mxu0 0.0
        %611 = vmatpush1.msra.mxu0 0.0
        %612 = vmatprep.subr.mxu0 0.0
        %613 = vmatpush1.msra.mxu0 0.0
        %614 = vmatprep.subr.mxu0 0.0
        %615 = vmatpush1.msra.mxu0 0.0
        %616 = vmatprep.subr.mxu0 0.0
        %617 = vmatpush1.msra.mxu0 0.0
        %618 = vmatprep.subr.mxu0 0.0
        %619 = vmatpush1.msra.mxu0 0.0
        %620 = vmatprep.subr.mxu0 0.0
        %621 = vmatpush1.msra.mxu0 0.0
        %622 = vmatprep.subr.mxu0 0.0
        %623 = vmatpush1.msra.mxu0 0.0
        %624 = vmatprep.subr.mxu0 0.0
        %625 = vmatpush1.msra.mxu0 0.0
        %626 = vmatprep.subr.mxu0 0.0
        %627 = vmatpush1.msra.mxu0 0.0
        %628 = vmatprep.subr.mxu0 0.0
        %629 = vmatpush1.msra.mxu0 0.0
        %630 = vmatprep.subr.mxu0 0.0
        %631 = vmatpush1.msra.mxu0 0.0
        %632 = vmatprep.subr.mxu0 0.0
        %633 = vmatpush1.msra.mxu0 0.0
        %634 = vmatprep.subr.mxu0 0.0
        %635 = vmatpush1.msra.mxu0 0.0
        %636 = vmatprep.mubr.f32.mxu0 0.0
        %637 = vmatmul.mubr.f32.gmra.mrb[0].mxu0 %v570
        %v638 = vpop.f32.mrb[0].mxu0
        %v639 = vadd.f32 %v567, %v638
        %v640 = vpop.f32.mrb[0].mxu0
        %641 = vdwg.mxu0
        %v642 = vadd.f32 %v217, %v639
        %v643 = vsel %vm568, %v642, 0.0
        %644 = vadd.xlane.f32.xlu0 %v643
        %v645 = vpop.xlane.xlu0 %644
        %v646 = vrcp.pop 32.0
        %v647 = vmul.f32 %v645, %v646
        %v648 = vsub.f32 %v642, %v647
        %v649 = vmul.f32 %v648, %v648
        %v650 = vsel %vm568, %v649, 0.0
        %651 = vadd.xlane.f32.xlu0 %v650
        %v652 = vpop.xlane.xlu0 %651
        %v653 = vmul.f32 %v652, %v646
        %v654 = vadd.f32 %v653, 1e-05
        %v655 = vrsqrt.pop %v654
        %v656 = vmul.f32 %v648, %v655
        %v657 = vlaneseq
        %v658 = vshrl.u32 %v657, 7
        %v659 = vsub.s32 5, %v658
        %v660 = vrot.slane %v200, %v659
        %v661 = vmul.f32 %v656, %v660
        %v662 = vlaneseq
        %v663 = vshrl.u32 %v662, 7
        %v664 = vsub.s32 6, %v663
        %v665 = vrot.slane %v200, %v664
        %v666 = vadd.f32 %v661, %v665
        %v667 = vlaneseq
        %v668 = vshrl.u32 %v667, 7
        %v669 = vsub.s32 7, %v668
        %v670 = vrot.slane %v200, %v669
        %v672 = vsel %vm568, %v666, 0
        %674 = vmatprep.subr.mxu0 0.0
        %675 = vmatpush1.msra.mxu0 %v184
        %676 = vmatprep.subr.mxu0 0.0
        %677 = vmatpush1.msra.mxu0 %v185
        %678 = vmatprep.subr.mxu0 0.0
        %679 = vmatpush1.msra.mxu0 %v186
        %680 = vmatprep.subr.mxu0 0.0
        %681 = vmatpush1.msra.mxu0 %v187
        %682 = vmatprep.subr.mxu0 0.0
        %683 = vmatpush1.msra.mxu0 0.0
        %684 = vmatprep.subr.mxu0 0.0
        %685 = vmatpush1.msra.mxu0 0.0
        %686 = vmatprep.subr.mxu0 0.0
        %687 = vmatpush1.msra.mxu0 0.0
        %688 = vmatprep.subr.mxu0 0.0
        %689 = vmatpush1.msra.mxu0 0.0
        %690 = vmatprep.subr.mxu0 0.0
        %691 = vmatpush1.msra.mxu0 0.0
        %692 = vmatprep.subr.mxu0 0.0
        %693 = vmatpush1.msra.mxu0 0.0
        %694 = vmatprep.subr.mxu0 0.0
        %695 = vmatpush1.msra.mxu0 0.0
        %696 = vmatprep.subr.mxu0 0.0
        %697 = vmatpush1.msra.mxu0 0.0
        %698 = vmatprep.subr.mxu0 0.0
        %699 = vmatpush1.msra.mxu0 0.0
        %700 = vmatprep.subr.mxu0 0.0
        %701 = vmatpush1.msra.mxu0 0.0
        %702 = vmatprep.subr.mxu0 0.0
        %703 = vmatpush1.msra.mxu0 0.0
        %704 = vmatprep.subr.mxu0 0.0
        %705 = vmatpush1.msra.mxu0 0.0
        %706 = vmatprep.subr.mxu0 0.0
        %707 = vmatpush1.msra.mxu0 0.0
        %708 = vmatprep.subr.mxu0 0.0
        %709 = vmatpush1.msra.mxu0 0.0
        %710 = vmatprep.subr.mxu0 0.0
        %711 = vmatpush1.msra.mxu0 0.0
        %712 = vmatprep.subr.mxu0 0.0
        %713 = vmatpush1.msra.mxu0 0.0
        %714 = vmatprep.subr.mxu0 0.0
        %715 = vmatpush1.msra.mxu0 0.0
        %716 = vmatprep.subr.mxu0 0.0
        %717 = vmatpush1.msra.mxu0 0.0
        %718 = vmatprep.subr.mxu0 0.0
        %719 = vmatpush1.msra.mxu0 0.0
        %720 = vmatprep.subr.mxu0 0.0
        %721 = vmatpush1.msra.mxu0 0.0
        %722 = vmatprep.subr.mxu0 0.0
        %723 = vmatpush1.msra.mxu0 0.0
        %724 = vmatprep.subr.mxu0 0.0
        %725 = vmatpush1.msra.mxu0 0.0
        %726 = vmatprep.subr.mxu0 0.0
        %727 = vmatpush1.msra.mxu0 0.0
        %728 = vmatprep.subr.mxu0 0.0
        %729 = vmatpush1.msra.mxu0 0.0
        %730 = vmatprep.subr.mxu0 0.0
        %731 = vmatpush1.msra.mxu0 0.0
        %732 = vmatprep.subr.mxu0 0.0
        %733 = vmatpush1.msra.mxu0 0.0
        %734 = vmatprep.subr.mxu0 0.0
        %735 = vmatpush1.msra.mxu0 0.0
        %736 = vmatprep.subr.mxu0 0.0
        %737 = vmatpush1.msra.mxu0 0.0
        %738 = vmatprep.mubr.f32.mxu0 0.0
        %739 = vmatmul.mubr.f32.gmra.mrb[0].mxu0 %v672
        %v740 = vpop.f32.mrb[0].mxu0
        %v741 = vadd.f32 %v670, %v740
        %v742 = vpop.f32.mrb[0].mxu0
        %743 = vdwg.mxu0
        %v744 = vmax.f32 %v741, 0.0
        %v745 = vlaneseq
        %v746 = vshrl.u32 %v745, 7
        %v747 = vsub.s32 0, %v746
        %v748 = vrot.slane %v201, %v747
        %vm749 = vcmask 523264
        %v751 = vsel %vm749, %v744, 0
        %753 = vmatprep.subr.mxu0 0.0
        %754 = vmatpush1.msra.mxu0 %v188
        %755 = vmatprep.subr.mxu0 0.0
        %756 = vmatpush1.msra.mxu0 %v189
        %757 = vmatprep.subr.mxu0 0.0
        %758 = vmatpush1.msra.mxu0 %v190
        %759 = vmatprep.subr.mxu0 0.0
        %760 = vmatpush1.msra.mxu0 %v191
        %761 = vmatprep.subr.mxu0 0.0
        %762 = vmatpush1.msra.mxu0 %v192
        %763 = vmatprep.subr.mxu0 0.0
        %764 = vmatpush1.msra.mxu0 %v193
        %765 = vmatprep.subr.mxu0 0.0
        %766 = vmatpush1.msra.mxu0 %v194
        %767 = vmatprep.subr.mxu0 0.0
        %768 = vmatpush1.msra.mxu0 %v195
        %769 = vmatprep.subr.mxu0 0.0
        %770 = vmatpush1.msra.mxu0 0.0
        %771 = vmatprep.subr.mxu0 0.0
        %772 = vmatpush1.msra.mxu0 0.0
        %773 = vmatprep.subr.mxu0 0.0
        %774 = vmatpush1.msra.mxu0 0.0
        %775 = vmatprep.subr.mxu0 0.0
        %776 = vmatpush1.msra.mxu0 0.0
        %777 = vmatprep.subr.mxu0 0.0
        %778 = vmatpush1.msra.mxu0 0.0
        %779 = vmatprep.subr.mxu0 0.0
        %780 = vmatpush1.msra.mxu0 0.0
        %781 = vmatprep.subr.mxu0 0.0
        %782 = vmatpush1.msra.mxu0 0.0
        %783 = vmatprep.subr.mxu0 0.0
        %784 = vmatpush1.msra.mxu0 0.0
        %785 = vmatprep.subr.mxu0 0.0
        %786 = vmatpush1.msra.mxu0 0.0
        %787 = vmatprep.subr.mxu0 0.0
        %788 = vmatpush1.msra.mxu0 0.0
        %789 = vmatprep.subr.mxu0 0.0
        %790 = vmatpush1.msra.mxu0 0.0
        %791 = vmatprep.subr.mxu0 0.0
        %792 = vmatpush1.msra.mxu0 0.0
        %793 = vmatprep.subr.mxu0 0.0
        %794 = vmatpush1.msra.mxu0 0.0
        %795 = vmatprep.subr.mxu0 0.0
        %796 = vmatpush1.msra.mxu0 0.0
        %797 = vmatprep.subr.mxu0 0.0
        %798 = vmatpush1.msra.mxu0 0.0
        %799 = vmatprep.subr.mxu0 0.0
        %800 = vmatpush1.msra.mxu0 0.0
        %801 = vmatprep.subr.mxu0 0.0
        %802 = vmatpush1.msra.mxu0 0.0
        %803 = vmatprep.subr.mxu0 0.0
        %804 = vmatpush1.msra.mxu0 0.0
        %805 = vmatprep.subr.mxu0 0.0
        %806 = vmatpush1.msra.mxu0 0.0
        %807 = vmatprep.subr.mxu0 0.0
        %808 = vmatpush1.msra.mxu0 0.0
        %809 = vmatprep.subr.mxu0 0.0
        %810 = vmatpush1.msra.mxu0 0.0
        %811 = vmatprep.subr.mxu0 0.0
        %812 = vmatpush1.msra.mxu0 0.0
        %813 = vmatprep.subr.mxu0 0.0
        %814 = vmatpush1.msra.mxu0 0.0
        %815 = vmatprep.subr.mxu0 0.0
        %816 = vmatpush1.msra.mxu0 0.0
        %817 = vmatprep.mubr.f32.mxu0 0.0
        %818 = vmatmul.mubr.f32.gmra.mrb[0].mxu0 %v751
        %v819 = vpop.f32.mrb[0].mxu0
        %v820 = vadd.f32 %v748, %v819
        %v821 = vpop.f32.mrb[0].mxu0
        %822 = vdwg.mxu0
        %v823 = vadd.f32 %v666, %v820
        %v824 = vsel %vm568, %v823, 0.0
        %825 = vadd.xlane.f32.xlu0 %v824
        %v826 = vpop.xlane.xlu0 %825
        %v827 = vmul.f32 %v826, %v646
        %v828 = vsub.f32 %v823, %v827
        %v829 = vmul.f32 %v828, %v828
        %v830 = vsel %vm568, %v829, 0.0
        %831 = vadd.xlane.f32.xlu0 %v830
        %v832 = vpop.xlane.xlu0 %831
        %v833 = vmul.f32 %v832, %v646
        %v834 = vadd.f32 %v833, 1e-05
        %v835 = vrsqrt.pop %v834
        %v836 = vmul.f32 %v828, %v835
        %v837 = vlaneseq
        %v838 = vshrl.u32 %v837, 7
        %v839 = vsub.s32 1, %v838
        %v840 = vrot.slane %v201, %v839
        %v841 = vmul.f32 %v836, %v840
        %v842 = vlaneseq
        %v843 = vshrl.u32 %v842, 7
        %v844 = vsub.s32 2, %v843
        %v845 = vrot.slane %v201, %v844
        %v846 = vadd.f32 %v841, %v845
        %v847 = vsel %vm568, %v846, 0.0
        %v848 = vrot.slane %v847, 4
        %v849 = vadd.f32 %v847, %v848
        %v850 = vrot.slane %v849, 2
        %v851 = vadd.f32 %v849, %v850
        %v852 = vrot.slane %v851, 1
        %v853 = vadd.f32 %v851, %v852
        %v854 = vrcp.pop 8.0
        %v855 = vmul.f32 %v853, %v854
        %v857 = vrot.slane %v201, 3
        %v860 = vsel %vm568, %v855, 0
        %862 = vmatprep.subr.mxu0 0.0
        %863 = vmatpush1.msra.mxu0 %v196
        %864 = vmatprep.subr.mxu0 0.0
        %865 = vmatpush1.msra.mxu0 %v197
        %866 = vmatprep.subr.mxu0 0.0
        %867 = vmatpush1.msra.mxu0 %v198
        %868 = vmatprep.subr.mxu0 0.0
        %869 = vmatpush1.msra.mxu0 %v199
        %870 = vmatprep.subr.mxu0 0.0
        %871 = vmatpush1.msra.mxu0 0.0
        %872 = vmatprep.subr.mxu0 0.0
        %873 = vmatpush1.msra.mxu0 0.0
        %874 = vmatprep.subr.mxu0 0.0
        %875 = vmatpush1.msra.mxu0 0.0
        %876 = vmatprep.subr.mxu0 0.0
        %877 = vmatpush1.msra.mxu0 0.0
        %878 = vmatprep.subr.mxu0 0.0
        %879 = vmatpush1.msra.mxu0 0.0
        %880 = vmatprep.subr.mxu0 0.0
        %881 = vmatpush1.msra.mxu0 0.0
        %882 = vmatprep.subr.mxu0 0.0
        %883 = vmatpush1.msra.mxu0 0.0
        %884 = vmatprep.subr.mxu0 0.0
        %885 = vmatpush1.msra.mxu0 0.0
        %886 = vmatprep.subr.mxu0 0.0
        %887 = vmatpush1.msra.mxu0 0.0
        %888 = vmatprep.subr.mxu0 0.0
        %889 = vmatpush1.msra.mxu0 0.0
        %890 = vmatprep.subr.mxu0 0.0
        %891 = vmatpush1.msra.mxu0 0.0
        %892 = vmatprep.subr.mxu0 0.0
        %893 = vmatpush1.msra.mxu0 0.0
        %894 = vmatprep.subr.mxu0 0.0
        %895 = vmatpush1.msra.mxu0 0.0
        %896 = vmatprep.subr.mxu0 0.0
        %897 = vmatpush1.msra.mxu0 0.0
        %898 = vmatprep.subr.mxu0 0.0
        %899 = vmatpush1.msra.mxu0 0.0
        %900 = vmatprep.subr.mxu0 0.0
        %901 = vmatpush1.msra.mxu0 0.0
        %902 = vmatprep.subr.mxu0 0.0
        %903 = vmatpush1.msra.mxu0 0.0
        %904 = vmatprep.subr.mxu0 0.0
        %905 = vmatpush1.msra.mxu0 0.0
        %906 = vmatprep.subr.mxu0 0.0
        %907 = vmatpush1.msra.mxu0 0.0
        %908 = vmatprep.subr.mxu0 0.0
        %909 = vmatpush1.msra.mxu0 0.0
        %910 = vmatprep.subr.mxu0 0.0
        %911 = vmatpush1.msra.mxu0 0.0
        %912 = vmatprep.subr.mxu0 0.0
        %913 = vmatpush1.msra.mxu0 0.0
        %914 = vmatprep.subr.mxu0 0.0
        %915 = vmatpush1.msra.mxu0 0.0
        %916 = vmatprep.subr.mxu0 0.0
        %917 = vmatpush1.msra.mxu0 0.0
        %918 = vmatprep.subr.mxu0 0.0
        %919 = vmatpush1.msra.mxu0 0.0
        %920 = vmatprep.subr.mxu0 0.0
        %921 = vmatpush1.msra.mxu0 0.0
        %922 = vmatprep.subr.mxu0 0.0
        %923 = vmatpush1.msra.mxu0 0.0
        %924 = vmatprep.subr.mxu0 0.0
        %925 = vmatpush1.msra.mxu0 0.0
        %926 = vmatprep.mubr.f32.mxu0 0.0
        %927 = vmatmul.mubr.f32.gmra.mrb[0].mxu0 %v860
        %v928 = vpop.f32.mrb[0].mxu0
        %v929 = vadd.f32 %v857, %v928
        %v930 = vpop.f32.mrb[0].mxu0
        %931 = vdwg.mxu0
        %932 = vst [vmem:[%s175] sm:$0x1] %v929
        %s933 = sand.u32 %s94, 1
        %s934 = scalar_lea.sflag [#allocation4], %s933
        %s935 = sand.u32 %s94, 1
        %s936 = scalar_lea.vmem [#allocation5], %s935
        // Predicated region
        $region37: #{tpu_custom_call.1} parent=31 // pred_check
          %p937 = pneg %p104
        $region38: #{tpu_custom_call.1} parent=31 // pred_check_branch
          %939 = sbr.rel (%p937) target = $region40
        $region39: #{tpu_custom_call.1} parent=31 // pred_region
          %s941 = ssub.s32 16, 16
          %942 = vsyncadd %s934, %s941
          %s943 = smul.addr %s18, 16
          %s944 = scalar_lea.hbm %s3, %s943
          %s946 = sshll.u32 %s936, 4
          %s947 = int_to_ptr.vmem [resolvable:$true] %s946
          %949 = dma.vmem_to_hbm [thread:$0]  %s947, 16, %s944, %s934
        $region40: #{tpu_custom_call.1} parent=31 // pred_fallthru
          _
      $region32: #{tpu_custom_call.1} parent=5 // pred_fallthru
        _
      %p950 = scmp.le.s32.totalorder 2, %s13
      // Predicated region
      $region41: #{tpu_custom_call.1} parent=5 // pred_check
        %p951 = pneg %p950
      $region42: #{tpu_custom_call.1} parent=5 // pred_check_branch
        %953 = sbr.rel (%p951) target = $region44
      $region43: #{tpu_custom_call.1} parent=5 // pred_region
        %s954 = ssub.s32 %s13, 2
        // Predicated region
        $region45: #{tpu_custom_call.1} parent=43 // pred_check
          %p955 = pneg %p110
        $region46: #{tpu_custom_call.1} parent=43 // pred_check_branch
          %957 = sbr.rel (%p955) target = $region48
        $region47: #{tpu_custom_call.1} parent=43 // pred_region
          %s958 = sand.u32 %s95, 1
          %s959 = scalar_lea.sflag [#allocation4], %s958
          %s960 = sand.u32 %s95, 1
          %s961 = scalar_lea.vmem [#allocation5], %s960
          %962 = dma.done %s959, 16
        $region48: #{tpu_custom_call.1} parent=43 // pred_fallthru
          _
      $region44: #{tpu_custom_call.1} parent=5 // pred_fallthru
        _
    $region6: #{tpu_custom_call.1} parent=1 // loop_footer
      %s17 = sadd.s32 1, %s13
    $region7: #{tpu_custom_call.1} parent=1 // loop_footer_branch
      %12 = sbr.rel target = $region3
    $region8: #{tpu_custom_call.1} parent=1 // loop_exit
      _
    %963 = vsyncpa [#allocation3], 1
    %s964 = scalar_lea.sflag [#allocation3], 1
    %965 = vsyncpa %s964, 1
    %966 = vsyncpa [#allocation4], 1
    %s967 = scalar_lea.sflag [#allocation4], 1
    %968 = vsyncpa %s967, 1

</llo_original>
